<compile_context>
chip_gen: v6e
topology: v6e:2x2x1
jax: 0.10.0
libtpu: 0.0.40
codegen_flags: <defaults>
</compile_context>

<pallas_src>
import functools

import jax
import jax.numpy as jnp
from jax.experimental import pallas as pl
from jax.experimental.pallas import tpu as pltpu

LEAKY_SLOPE = 0.2
BN_EPS = 1e-5
KSIZE = 4
STRIDE = 2
PAD = 1


def _round_up(x, m):
    return (x + m - 1) // m * m


def _encoder_kernel(pat_ref, w_ref, g_ref, b_ref, *refs, m_total, with_mid):
    """grid = (pass, m_tile).  pass 0: matmul + stats (+mid).  pass 1: matmul
    recompute + BN affine + LeakyReLU."""
    if with_mid:
        y_ref, mid_ref, sum_ref, ssq_ref = refs
    else:
        y_ref, sum_ref, ssq_ref = refs
        mid_ref = None

    p = pl.program_id(0)    # pass index
    mt = pl.program_id(1)   # M-tile index

    # Conv-as-matmul on the MXU: (Cout, K) @ (K, TM) -> (Cout, TM).
    # Output tile is lane-dense (M on the lane axis).
    z = jnp.dot(w_ref[...], pat_ref[...], preferred_element_type=jnp.float32)

    @pl.when((p == 0) & (mt == 0))
    def _init():
        sum_ref[...] = jnp.zeros_like(sum_ref)
        ssq_ref[...] = jnp.zeros_like(ssq_ref)

    @pl.when(p == 0)
    def _pass0():
        # Per-channel sum / sum-of-squares.  Zero-padded M columns contribute
        # nothing; we divide by the true M at finalize time.
        sum_ref[...] += jnp.sum(z, axis=1, keepdims=True)
        ssq_ref[...] += jnp.sum(z * z, axis=1, keepdims=True)
        # Placeholder write so the revisited output block never flushes
        # uninitialized VMEM; overwritten with the real value in pass 1.
        y_ref[...] = z.astype(y_ref.dtype)
        if with_mid:
            mid_ref[...] = z.astype(mid_ref.dtype)

    @pl.when(p == 1)
    def _pass1():
        inv_m = 1.0 / m_total
        mean = sum_ref[...] * inv_m                       # (Cout, 1)
        var = jnp.maximum(ssq_ref[...] * inv_m - mean * mean, 0.0)
        inv_std = jax.lax.rsqrt(var + BN_EPS)             # EUP slot
        scale = g_ref[...] * inv_std
        shift = b_ref[...] - mean * scale
        zn = z * scale + shift
        y_ref[...] = jnp.where(zn >= 0.0, zn, LEAKY_SLOPE * zn).astype(y_ref.dtype)
        if with_mid:
            # The mid block is revisited in this pass; rewrite the identical
            # recomputed z so the automatic writeback holds valid data.
            mid_ref[...] = z.astype(mid_ref.dtype)


def encoder_block(x, weight, gamma, beta, out=False, *, tile_m=512):
    """x: (N, Cin, H, W) f32; weight: (Cout, Cin, 4, 4); gamma/beta: (Cout,)."""
    N, Cin, H, W = x.shape
    Cout = weight.shape[0]
    Ho = (H + 2 * PAD - KSIZE) // STRIDE + 1
    Wo = (W + 2 * PAD - KSIZE) // STRIDE + 1
    M = N * Ho * Wo
    K = Cin * KSIZE * KSIZE

    # --- im2col (plain-JAX glue) emitted as (K, M): K ordered (cin, kh, kw)
    # to match PyTorch's (Cout, Cin, Kh, Kw) weight flattening, M ordered
    # (n, oh, ow).
    # TODO(synk): fold im2col into the kernel (tile over output rows, build the
    # 16 shifted views in VMEM) to remove the HBM-materialized patches array.
    xp = jnp.pad(x, ((0, 0), (0, 0), (PAD, PAD), (PAD, PAD)))
    cols = []
    for kh in range(KSIZE):
        for kw in range(KSIZE):
            cols.append(xp[:, :, kh:kh + STRIDE * Ho:STRIDE,
                           kw:kw + STRIDE * Wo:STRIDE])
    pat = jnp.stack(cols, axis=2)                          # (N, Cin, 16, Ho, Wo)
    pat_t = pat.transpose(1, 2, 0, 3, 4).reshape(K, M).astype(jnp.float32)

    # --- tile / pad M.  Zero pad columns do not perturb the BN statistics
    # because the normalization divides by the true M.
    tm = min(tile_m, _round_up(M, 128))
    m_pad = _round_up(M, tm)
    if m_pad != M:
        pat_t = jnp.pad(pat_t, ((0, 0), (0, m_pad - M)))
    n_tiles = m_pad // tm

    w2 = weight.reshape(Cout, K).astype(jnp.float32)       # (Cout, K)
    g2 = gamma.reshape(Cout, 1).astype(jnp.float32)
    b2 = beta.reshape(Cout, 1).astype(jnp.float32)

    kernel = functools.partial(_encoder_kernel, m_total=float(M), with_mid=out)

    out_shape = [jax.ShapeDtypeStruct((Cout, m_pad), jnp.float32)]
    out_specs = [pl.BlockSpec((Cout, tm), lambda p, mt: (0, mt))]
    if out:
        out_shape.append(jax.ShapeDtypeStruct((Cout, m_pad), jnp.float32))
        out_specs.append(pl.BlockSpec((Cout, tm), lambda p, mt: (0, mt)))

    n_out = 2 if out else 1
    cost = pl.CostEstimate(
        flops=2 * 2 * m_pad * K * Cout,                    # matmul in both passes
        transcendentals=Cout * n_tiles,                    # rsqrt in pass 1
        bytes_accessed=4 * (2 * K * m_pad + K * Cout + 2 * Cout
                            + (n_out + 1) * Cout * m_pad),
    )

    results = pl.pallas_call(
        kernel,
        grid=(2, n_tiles),
        in_specs=[
            pl.BlockSpec((K, tm), lambda p, mt: (0, mt)),    # patches tile
            pl.BlockSpec((Cout, K), lambda p, mt: (0, 0)),   # weights (resident)
            pl.BlockSpec((Cout, 1), lambda p, mt: (0, 0)),   # gamma (resident)
            pl.BlockSpec((Cout, 1), lambda p, mt: (0, 0)),   # beta (resident)
        ],
        out_specs=out_specs,
        out_shape=out_shape,
        scratch_shapes=[
            pltpu.VMEM((Cout, 1), jnp.float32),   # per-channel sum(z)
            pltpu.VMEM((Cout, 1), jnp.float32),   # per-channel sum(z*z)
        ],
        compiler_params=pltpu.CompilerParams(
            # Both axes sequential: the tile axis feeds a shared VMEM
            # accumulator and the pass axis is a true dependency.
            # TODO(synk): on v7x, mark the tile axis "parallel" and combine
            # per-core partial sums via CMEM/VMEM_SHARED for 2-TC scaling.
            dimension_semantics=("arbitrary", "arbitrary"),
            vmem_limit_bytes=32 * 1024 * 1024,
        ),
        cost_estimate=cost,
    )(pat_t, w2, g2, b2)

    def to_nchw(flat):
        return flat[:, :M].reshape(Cout, N, Ho, Wo).transpose(1, 0, 2, 3)

    if out:
        y_flat, mid_flat = results
        return to_nchw(y_flat), to_nchw(mid_flat)
    (y_flat,) = results
    return to_nchw(y_flat)


def _reference(x, weight, gamma, beta):
    """Pure-JAX reference (training-mode BN) for a sanity check."""
    z = jax.lax.conv_general_dilated(
        x, weight, window_strides=(STRIDE, STRIDE),
        padding=((PAD, PAD), (PAD, PAD)),
        dimension_numbers=("NCHW", "OIHW", "NCHW"),
        precision=jax.lax.Precision.HIGHEST)
    mean = z.mean(axis=(0, 2, 3), keepdims=True)
    var = ((z - mean) ** 2).mean(axis=(0, 2, 3), keepdims=True)
    zn = (z - mean) * jax.lax.rsqrt(var + BN_EPS)
    zn = zn * gamma.reshape(1, -1, 1, 1) + beta.reshape(1, -1, 1, 1)
    y = jnp.where(zn >= 0.0, zn, LEAKY_SLOPE * zn)
    return y, z


if __name__ == "__main__":
    key = jax.random.PRNGKey(0)
    k_x, k_w = jax.random.split(key)

    N, Cin, H, W = 2, 4, 16, 16
    Cout = 8

    x = jax.random.normal(k_x, (N, Cin, H, W), dtype=jnp.float32)
    weight = 0.05 * jax.random.normal(k_w, (Cout, Cin, KSIZE, KSIZE),
                                      dtype=jnp.float32)
    gamma = jnp.ones((Cout,), dtype=jnp.float32)   # BatchNorm2d default weight
    beta = jnp.zeros((Cout,), dtype=jnp.float32)   # BatchNorm2d default bias

    y, mid = encoder_block(x, weight, gamma, beta, out=True)
    y_only = encoder_block(x, weight, gamma, beta, out=False)
    jax.block_until_ready((y, mid, y_only))

    assert y.shape == (N, Cout, H // 2, W // 2)
    assert mid.shape == (N, Cout, H // 2, W // 2)
    assert y_only.shape == (N, Cout, H // 2, W // 2)

    y_ref, mid_ref = _reference(x, weight, gamma, beta)
    assert float(jnp.max(jnp.abs(mid - mid_ref))) < 2e-2
    assert float(jnp.max(jnp.abs(y - y_ref))) < 2e-2
    assert float(jnp.max(jnp.abs(y_only - y_ref))) < 2e-2

    print("KERNEL_OK")
</pallas_src>

<mosaic_0001>
module attributes {stable_mosaic.version = 11 : i64} {
  func.func @_encoder_kernel(%arg0: i32, %arg1: i32, %arg2: memref<64x128xf32, #tpu.memory_space<vmem>>, %arg3: memref<8x64xf32, #tpu.memory_space<vmem>>, %arg4: memref<8x1xf32, #tpu.memory_space<vmem>>, %arg5: memref<8x1xf32, #tpu.memory_space<vmem>>, %arg6: memref<8x128xf32, #tpu.memory_space<vmem>>, %arg7: memref<8x128xf32, #tpu.memory_space<vmem>>, %arg8: memref<8x1xf32, #tpu.memory_space<vmem>>, %arg9: memref<8x1xf32, #tpu.memory_space<vmem>>) attributes {dimension_semantics = [#tpu.dimension_semantics<arbitrary>, #tpu.dimension_semantics<arbitrary>], iteration_bounds = array<i64: 2, 1>, scalar_prefetch = 0 : i64, scratch_operands = 2 : i64, tpu.core_type = #tpu.core_type<tc>, window_params = [{transform_indices = @transform_0, window_bounds = array<i64: 64, 128>}, {pipeline_mode = #tpu.pipeline_mode<synchronous>, transform_indices = @transform_1, window_bounds = array<i64: 8, 64>}, {pipeline_mode = #tpu.pipeline_mode<synchronous>, transform_indices = @transform_2, window_bounds = array<i64: 8, 1>}, {pipeline_mode = #tpu.pipeline_mode<synchronous>, transform_indices = @transform_3, window_bounds = array<i64: 8, 1>}, {transform_indices = @transform_4, window_bounds = array<i64: 8, 128>}, {transform_indices = @transform_5, window_bounds = array<i64: 8, 128>}]} {
    %c0 = arith.constant 0 : index
    %c0_0 = arith.constant 0 : index
    %0 = vector.load %arg3[%c0, %c0_0] : memref<8x64xf32, #tpu.memory_space<vmem>>, vector<8x64xf32>
    %c0_1 = arith.constant 0 : index
    %c0_2 = arith.constant 0 : index
    %1 = vector.load %arg2[%c0_1, %c0_2] : memref<64x128xf32, #tpu.memory_space<vmem>>, vector<64x128xf32>
    %cst = arith.constant dense<0.000000e+00> : vector<8x128xf32>
    %2 = tpu.matmul %0, %1, %cst {dimension_numbers = #tpu.dot_dimension_numbers<[1], [0], [0], [1], [0, 0, 1, 1], [], []>} : vector<8x64xf32>, vector<64x128xf32>, vector<8x128xf32> -> vector<8x128xf32>
    %c0_i32 = arith.constant 0 : i32
    %3 = arith.cmpi eq, %arg0, %c0_i32 : i32
    %c0_i32_3 = arith.constant 0 : i32
    %4 = arith.cmpi eq, %arg1, %c0_i32_3 : i32
    %5 = arith.andi %3, %4 : i1
    %6 = arith.extui %5 : i1 to i32
    %c0_i32_4 = arith.constant 0 : i32
    %7 = arith.cmpi ne, %6, %c0_i32_4 : i32
    scf.if %7 {
      %cst_8 = arith.constant 0.000000e+00 : f32
      %14 = vector.broadcast %cst_8 : f32 to vector<8x1xf32>
      %c0_9 = arith.constant 0 : index
      %c0_10 = arith.constant 0 : index
      %15 = vector.load %arg8[%c0_9, %c0_10] : memref<8x1xf32, #tpu.memory_space<vmem>>, vector<8x1xf32>
      tpu.vector_store %arg8[%c0_9, %c0_10], %14 {strides = array<i32>} : memref<8x1xf32, #tpu.memory_space<vmem>>, vector<8x1xf32>,
      %cst_11 = arith.constant 0.000000e+00 : f32
      %16 = vector.broadcast %cst_11 : f32 to vector<8x1xf32>
      %c0_12 = arith.constant 0 : index
      %c0_13 = arith.constant 0 : index
      %17 = vector.load %arg9[%c0_12, %c0_13] : memref<8x1xf32, #tpu.memory_space<vmem>>, vector<8x1xf32>
      tpu.vector_store %arg9[%c0_12, %c0_13], %16 {strides = array<i32>} : memref<8x1xf32, #tpu.memory_space<vmem>>, vector<8x1xf32>,
    } else {
    }
    %c0_i32_5 = arith.constant 0 : i32
    %8 = arith.cmpi eq, %arg0, %c0_i32_5 : i32
    %9 = arith.extui %8 : i1 to i32
    %c0_i32_6 = arith.constant 0 : i32
    %10 = arith.cmpi ne, %9, %c0_i32_6 : i32
    scf.if %10 {
      %c0_8 = arith.constant 0 : index
      %c0_9 = arith.constant 0 : index
      %14 = vector.load %arg8[%c0_8, %c0_9] : memref<8x1xf32, #tpu.memory_space<vmem>>, vector<8x1xf32>
      %cst_10 = arith.constant dense<0.000000e+00> : vector<8xf32>
      %15 = vector.multi_reduction <add>, %2, %cst_10 [1] : vector<8x128xf32> to vector<8xf32>
      %16 = vector.shape_cast %15 : vector<8xf32> to vector<8x1xf32>
      %17 = arith.addf %14, %16 : vector<8x1xf32>
      %c0_11 = arith.constant 0 : index
      %c0_12 = arith.constant 0 : index
      %18 = vector.load %arg8[%c0_11, %c0_12] : memref<8x1xf32, #tpu.memory_space<vmem>>, vector<8x1xf32>
      tpu.vector_store %arg8[%c0_11, %c0_12], %17 {strides = array<i32>} : memref<8x1xf32, #tpu.memory_space<vmem>>, vector<8x1xf32>,
      %c0_13 = arith.constant 0 : index
      %c0_14 = arith.constant 0 : index
      %19 = vector.load %arg9[%c0_13, %c0_14] : memref<8x1xf32, #tpu.memory_space<vmem>>, vector<8x1xf32>
      %20 = arith.mulf %2, %2 : vector<8x128xf32>
      %cst_15 = arith.constant dense<0.000000e+00> : vector<8xf32>
      %21 = vector.multi_reduction <add>, %20, %cst_15 [1] : vector<8x128xf32> to vector<8xf32>
      %22 = vector.shape_cast %21 : vector<8xf32> to vector<8x1xf32>
      %23 = arith.addf %19, %22 : vector<8x1xf32>
      %c0_16 = arith.constant 0 : index
      %c0_17 = arith.constant 0 : index
      %24 = vector.load %arg9[%c0_16, %c0_17] : memref<8x1xf32, #tpu.memory_space<vmem>>, vector<8x1xf32>
      tpu.vector_store %arg9[%c0_16, %c0_17], %23 {strides = array<i32>} : memref<8x1xf32, #tpu.memory_space<vmem>>, vector<8x1xf32>,
      %c0_18 = arith.constant 0 : index
      %c0_19 = arith.constant 0 : index
      %25 = vector.load %arg6[%c0_18, %c0_19] : memref<8x128xf32, #tpu.memory_space<vmem>>, vector<8x128xf32>
      tpu.vector_store %arg6[%c0_18, %c0_19], %2 {strides = array<i32>} : memref<8x128xf32, #tpu.memory_space<vmem>>, vector<8x128xf32>,
      %c0_20 = arith.constant 0 : index
      %c0_21 = arith.constant 0 : index
      %26 = vector.load %arg7[%c0_20, %c0_21] : memref<8x128xf32, #tpu.memory_space<vmem>>, vector<8x128xf32>
      tpu.vector_store %arg7[%c0_20, %c0_21], %2 {strides = array<i32>} : memref<8x128xf32, #tpu.memory_space<vmem>>, vector<8x128xf32>,
    } else {
    }
    %c1_i32 = arith.constant 1 : i32
    %11 = arith.cmpi eq, %arg0, %c1_i32 : i32
    %12 = arith.extui %11 : i1 to i32
    %c0_i32_7 = arith.constant 0 : i32
    %13 = arith.cmpi ne, %12, %c0_i32_7 : i32
    scf.if %13 {
      %c0_8 = arith.constant 0 : index
      %c0_9 = arith.constant 0 : index
      %14 = vector.load %arg8[%c0_8, %c0_9] : memref<8x1xf32, #tpu.memory_space<vmem>>, vector<8x1xf32>
      %cst_10 = arith.constant 7.812500e-03 : f32
      %15 = vector.broadcast %cst_10 : f32 to vector<8x1xf32>
      %16 = arith.mulf %14, %15 : vector<8x1xf32>
      %c0_11 = arith.constant 0 : index
      %c0_12 = arith.constant 0 : index
      %17 = vector.load %arg9[%c0_11, %c0_12] : memref<8x1xf32, #tpu.memory_space<vmem>>, vector<8x1xf32>
      %cst_13 = arith.constant 7.812500e-03 : f32
      %18 = vector.broadcast %cst_13 : f32 to vector<8x1xf32>
      %19 = arith.mulf %17, %18 : vector<8x1xf32>
      %20 = arith.mulf %16, %16 : vector<8x1xf32>
      %21 = arith.subf %19, %20 : vector<8x1xf32>
      %cst_14 = arith.constant 0.000000e+00 : f32
      %22 = vector.broadcast %cst_14 : f32 to vector<8x1xf32>
      %23 = arith.maximumf %21, %22 : vector<8x1xf32>
      %cst_15 = arith.constant 9.99999974E-6 : f32
      %24 = vector.broadcast %cst_15 : f32 to vector<8x1xf32>
      %25 = arith.addf %23, %24 : vector<8x1xf32>
      %26 = math.rsqrt %25 : vector<8x1xf32>
      %c0_16 = arith.constant 0 : index
      %c0_17 = arith.constant 0 : index
      %27 = vector.load %arg4[%c0_16, %c0_17] : memref<8x1xf32, #tpu.memory_space<vmem>>, vector<8x1xf32>
      %28 = arith.mulf %27, %26 : vector<8x1xf32>
      %c0_18 = arith.constant 0 : index
      %c0_19 = arith.constant 0 : index
      %29 = vector.load %arg5[%c0_18, %c0_19] : memref<8x1xf32, #tpu.memory_space<vmem>>, vector<8x1xf32>
      %30 = arith.mulf %16, %28 : vector<8x1xf32>
      %31 = arith.subf %29, %30 : vector<8x1xf32>
      %32 = vector.broadcast %28 : vector<8x1xf32> to vector<8x128xf32>
      %33 = arith.mulf %2, %32 : vector<8x128xf32>
      %34 = vector.broadcast %31 : vector<8x1xf32> to vector<8x128xf32>
      %35 = arith.addf %33, %34 : vector<8x128xf32>
      %cst_20 = arith.constant 0.000000e+00 : f32
      %36 = vector.broadcast %cst_20 : f32 to vector<8x128xf32>
      %37 = arith.cmpf oge, %35, %36 : vector<8x128xf32>
      %cst_21 = arith.constant 2.000000e-01 : f32
      %38 = vector.broadcast %cst_21 : f32 to vector<8x128xf32>
      %39 = arith.mulf %38, %35 : vector<8x128xf32>
      %40 = arith.select %37, %35, %39 : vector<8x128xi1>, vector<8x128xf32>
      %c0_22 = arith.constant 0 : index
      %c0_23 = arith.constant 0 : index
      %41 = vector.load %arg6[%c0_22, %c0_23] : memref<8x128xf32, #tpu.memory_space<vmem>>, vector<8x128xf32>
      tpu.vector_store %arg6[%c0_22, %c0_23], %40 {strides = array<i32>} : memref<8x128xf32, #tpu.memory_space<vmem>>, vector<8x128xf32>,
      %c0_24 = arith.constant 0 : index
      %c0_25 = arith.constant 0 : index
      %42 = vector.load %arg7[%c0_24, %c0_25] : memref<8x128xf32, #tpu.memory_space<vmem>>, vector<8x128xf32>
      tpu.vector_store %arg7[%c0_24, %c0_25], %2 {strides = array<i32>} : memref<8x128xf32, #tpu.memory_space<vmem>>, vector<8x128xf32>,
    } else {
    }
    return
  }
  func.func @transform_0(%arg0: i32, %arg1: i32) -> (i32, i32) {
    %c0_i32 = arith.constant 0 : i32
    %c0_i32_0 = arith.constant 0 : i32
    return %c0_i32, %arg1 : i32, i32
  }
  func.func @transform_1(%arg0: i32, %arg1: i32) -> (i32, i32) {
    %c0_i32 = arith.constant 0 : i32
    %c0_i32_0 = arith.constant 0 : i32
    %c0_i32_1 = arith.constant 0 : i32
    return %c0_i32, %c0_i32_0 : i32, i32
  }
  func.func @transform_2(%arg0: i32, %arg1: i32) -> (i32, i32) {
    %c0_i32 = arith.constant 0 : i32
    %c0_i32_0 = arith.constant 0 : i32
    %c0_i32_1 = arith.constant 0 : i32
    return %c0_i32, %c0_i32_0 : i32, i32
  }
  func.func @transform_3(%arg0: i32, %arg1: i32) -> (i32, i32) {
    %c0_i32 = arith.constant 0 : i32
    %c0_i32_0 = arith.constant 0 : i32
    %c0_i32_1 = arith.constant 0 : i32
    return %c0_i32, %c0_i32_0 : i32, i32
  }
  func.func @transform_4(%arg0: i32, %arg1: i32) -> (i32, i32) {
    %c0_i32 = arith.constant 0 : i32
    %c0_i32_0 = arith.constant 0 : i32
    return %c0_i32, %arg1 : i32, i32
  }
  func.func @transform_5(%arg0: i32, %arg1: i32) -> (i32, i32) {
    %c0_i32 = arith.constant 0 : i32
    %c0_i32_0 = arith.constant 0 : i32
    return %c0_i32, %arg1 : i32, i32
  }
}

</mosaic_0001>

<llo_original>
// kernel: tpu_custom_call.1
$region0: #{tpu_custom_call.1}
  #allocation0 [shape = 'u32[]', space=smem, size = 0x4, offset = 0x4, fixed_abs, tag = 'smem constant byte address 0x4 - core index']
  #allocation1 [shape = 'u32[144,128]{1,0:T(1,128)}', space=vmem, size = 0x12000, scoped, tag = 'internal scratch']
  #allocation2 [shape = 'f32[8,1]{1,0:T(8,128)}', space=vmem, size = 0x1000, scoped, tag = 'scratch operand']
  #allocation3 [shape = 'f32[8,1]{1,0:T(8,128)}', space=vmem, size = 0x1000, scoped, tag = 'scratch operand']
  %s0 = inlined_call_operand.hbm [shape: f32[64,128], index: 0, kind: input, shape index: {}]
  %s1 = inlined_call_operand.vmem [shape: f32[8,64], index: 1, kind: input, shape index: {}]
  %s2 = inlined_call_operand.vmem [shape: f32[8,1], index: 2, kind: input, shape index: {}]
  %s3 = inlined_call_operand.vmem [shape: f32[8,1], index: 3, kind: input, shape index: {}]
  %s4 = inlined_call_operand.hbm [shape: f32[8,128], index: 4, kind: output, shape index: {0}]
  %s5 = inlined_call_operand.hbm [shape: f32[8,128], index: 5, kind: output, shape index: {1}]
  %6 = xla_tuple %s4, %s5
  %s7 = sld [smem:[#allocation0]]
  $region73: #{tpu_custom_call.1} parent=0
    _
  %s9 = ssub.s32 1, %s7
  %s10 = scalar_select 0, %s9, %s7
  $region1: #{tpu_custom_call.1} parent=0
    #allocation4 [shape = 'u8[32768]{0}', space=vmem, size = 0x8000, scoped, tag = 'input window, operand 0, single buffered']
    #allocation5 [shape = 's32[2]{0}', space=sflag, size = 0x8, scoped, tag = 'scoped memory for tpu_custom_call.1']
    #allocation6 [shape = 's32[2]{0}', space=sflag, size = 0x8, scoped, tag = 'scoped memory for tpu_custom_call.1']
    #allocation7 [shape = 'u8[4096]{0}', space=vmem, size = 0x1000, scoped, tag = 'output window, operand 0, single buffered']
    #allocation8 [shape = 'u8[4096]{0}', space=vmem, size = 0x1000, scoped, tag = 'output window, operand 1, single buffered']
    #allocation9 [shape = 's32[1]{0}', space=sflag, size = 0x4, scoped, tag = 'scoped memory for tpu_custom_call.1']
    %11 = vsyncpa [#allocation5], 0
    %12 = vsyncpa [#allocation6], 0
    %13 = vsyncpa [#allocation9], 0
    loop: start=0, step=1, limit=4
    $region2: #{tpu_custom_call.1} parent=1 // loop_pre_header
      _
    $region3: #{tpu_custom_call.1} parent=1 // loop_header
      %s15 = sphi 0, %s19
      %p16 = scmp.ge.s32.totalorder %s15, 4
      %s22 = sphi 0, %s34
      %s23 = sphi 0, %s30
      %s24 = sphi 0, %s22
      %s25 = sphi 0, %s23
      %s26 = sphi 0, %s24
      %s27 = sphi 0, %s25
      %s37 = sphi 0, %s39
      %s40 = sphi 0, %s37
      %s41 = sphi 0, %s40
      %s57 = sphi 0, %s41
      %s61 = sphi 0, %s61
      %s63 = sphi 0, %s61
      %s64 = sphi 0, %s63
      %s78 = sphi 0, %s64
      %s82 = sphi 0, %s82
      %s84 = sphi 0, %s82
      %s85 = sphi 0, %s84
      %s99 = sphi 0, %s85
      %s103 = sphi 0, %s103
      %s105 = sphi 0, %s103
      %s106 = sphi 0, %s105
      %s120 = sphi 0, %s106
      %s126 = sphi 0, %s128
      %s129 = sphi 0, %s126
      %s130 = sphi 0, %s129
      %s146 = sphi 0, %s130
      %s152 = sphi 0, %s154
      %s155 = sphi 0, %s152
      %s156 = sphi 0, %s155
      %s172 = sphi 0, %s156
    $region4: #{tpu_custom_call.1} parent=1 // loop_header_branch
      %18 = sbr.rel (%p16) target = $region8
    $region5: #{tpu_custom_call.1} parent=1 // loop_body
      %s20 = ssub.s32 %s15, 1
      %s21 = ssub.s32 %s15, 2
      %s28 = sadd.s32 1, %s23
      %p29 = scmp.ge.s32.totalorder %s28, 1
      %s30 = scalar_select %p29, 0, %s28
      %s31 = sadd.s32 1, %s22
      %s32 = scalar_select %p29, %s31, %s22
      %p33 = scmp.ge.s32.totalorder %s32, 2
      %s34 = scalar_select %p33, 0, %s32
      %s35 = ssub.s32 %s23, %s30
      %p36 = scmp.eq.s32.totalorder %s35, 0
      %s38 = sadd.s32 %s37, 1
      %s39 = scalar_select %p36, %s37, %s38
      %p42 = pneg %p36
      %p43 = scmp.eq.s32.totalorder %s15, 1
      %p44 = por %p42, %p43
      %p45 = scmp.ne.s32.totalorder %s37, %s40
      %p46 = scmp.eq.s32.totalorder %s15, 0
      %p47 = por %p45, %p46
      %p48 = scmp.ne.s32.totalorder %s37, %s40
      %p49 = scmp.eq.s32.totalorder %s20, 1
      %p50 = por %p48, %p49
      %p51 = scmp.ne.s32.totalorder %s40, %s41
      %p52 = scmp.eq.s32.totalorder %s20, 0
      %p53 = por %p51, %p52
      %p54 = scmp.ne.s32.totalorder %s40, %s41
      %p55 = scmp.eq.s32.totalorder %s21, 1
      %p56 = por %p54, %p55
      %p58 = scmp.ne.s32.totalorder %s41, %s57
      %p59 = scmp.eq.s32.totalorder %s21, 0
      %p60 = por %p58, %p59
      %s62 = sadd.s32 %s61, 1
      %p65 = scmp.eq.s32.totalorder %s15, 1
      %p66 = scmp.ne.s32.totalorder %s61, %s63
      %p67 = scmp.eq.s32.totalorder %s15, 0
      %p68 = por %p66, %p67
      %p69 = scmp.ne.s32.totalorder %s61, %s63
      %p70 = scmp.eq.s32.totalorder %s20, 1
      %p71 = por %p69, %p70
      %p72 = scmp.ne.s32.totalorder %s63, %s64
      %p73 = scmp.eq.s32.totalorder %s20, 0
      %p74 = por %p72, %p73
      %p75 = scmp.ne.s32.totalorder %s63, %s64
      %p76 = scmp.eq.s32.totalorder %s21, 1
      %p77 = por %p75, %p76
      %p79 = scmp.ne.s32.totalorder %s64, %s78
      %p80 = scmp.eq.s32.totalorder %s21, 0
      %p81 = por %p79, %p80
      %s83 = sadd.s32 %s82, 1
      %p86 = scmp.eq.s32.totalorder %s15, 1
      %p87 = scmp.ne.s32.totalorder %s82, %s84
      %p88 = scmp.eq.s32.totalorder %s15, 0
      %p89 = por %p87, %p88
      %p90 = scmp.ne.s32.totalorder %s82, %s84
      %p91 = scmp.eq.s32.totalorder %s20, 1
      %p92 = por %p90, %p91
      %p93 = scmp.ne.s32.totalorder %s84, %s85
      %p94 = scmp.eq.s32.totalorder %s20, 0
      %p95 = por %p93, %p94
      %p96 = scmp.ne.s32.totalorder %s84, %s85
      %p97 = scmp.eq.s32.totalorder %s21, 1
      %p98 = por %p96, %p97
      %p100 = scmp.ne.s32.totalorder %s85, %s99
      %p101 = scmp.eq.s32.totalorder %s21, 0
      %p102 = por %p100, %p101
      %s104 = sadd.s32 %s103, 1
      %p107 = scmp.eq.s32.totalorder %s15, 1
      %p108 = scmp.ne.s32.totalorder %s103, %s105
      %p109 = scmp.eq.s32.totalorder %s15, 0
      %p110 = por %p108, %p109
      %p111 = scmp.ne.s32.totalorder %s103, %s105
      %p112 = scmp.eq.s32.totalorder %s20, 1
      %p113 = por %p111, %p112
      %p114 = scmp.ne.s32.totalorder %s105, %s106
      %p115 = scmp.eq.s32.totalorder %s20, 0
      %p116 = por %p114, %p115
      %p117 = scmp.ne.s32.totalorder %s105, %s106
      %p118 = scmp.eq.s32.totalorder %s21, 1
      %p119 = por %p117, %p118
      %p121 = scmp.ne.s32.totalorder %s106, %s120
      %p122 = scmp.eq.s32.totalorder %s21, 0
      %p123 = por %p121, %p122
      %s124 = ssub.s32 %s23, %s30
      %p125 = scmp.eq.s32.totalorder %s124, 0
      %s127 = sadd.s32 %s126, 1
      %s128 = scalar_select %p125, %s126, %s127
      %p131 = pneg %p125
      %p132 = scmp.eq.s32.totalorder %s15, 1
      %p133 = por %p131, %p132
      %p134 = scmp.ne.s32.totalorder %s126, %s129
      %p135 = scmp.eq.s32.totalorder %s15, 0
      %p136 = por %p134, %p135
      %p137 = scmp.ne.s32.totalorder %s126, %s129
      %p138 = scmp.eq.s32.totalorder %s20, 1
      %p139 = por %p137, %p138
      %p140 = scmp.ne.s32.totalorder %s129, %s130
      %p141 = scmp.eq.s32.totalorder %s20, 0
      %p142 = por %p140, %p141
      %p143 = scmp.ne.s32.totalorder %s129, %s130
      %p144 = scmp.eq.s32.totalorder %s21, 1
      %p145 = por %p143, %p144
      %p147 = scmp.ne.s32.totalorder %s130, %s146
      %p148 = scmp.eq.s32.totalorder %s21, 0
      %p149 = por %p147, %p148
      %s150 = ssub.s32 %s23, %s30
      %p151 = scmp.eq.s32.totalorder %s150, 0
      %s153 = sadd.s32 %s152, 1
      %s154 = scalar_select %p151, %s152, %s153
      %p157 = pneg %p151
      %p158 = scmp.eq.s32.totalorder %s15, 1
      %p159 = por %p157, %p158
      %p160 = scmp.ne.s32.totalorder %s152, %s155
      %p161 = scmp.eq.s32.totalorder %s15, 0
      %p162 = por %p160, %p161
      %p163 = scmp.ne.s32.totalorder %s152, %s155
      %p164 = scmp.eq.s32.totalorder %s20, 1
      %p165 = por %p163, %p164
      %p166 = scmp.ne.s32.totalorder %s155, %s156
      %p167 = scmp.eq.s32.totalorder %s20, 0
      %p168 = por %p166, %p167
      %p169 = scmp.ne.s32.totalorder %s155, %s156
      %p170 = scmp.eq.s32.totalorder %s21, 1
      %p171 = por %p169, %p170
      %p173 = scmp.ne.s32.totalorder %s156, %s172
      %p174 = scmp.eq.s32.totalorder %s21, 0
      %p175 = por %p173, %p174
      %p176 = scmp.le.s32.totalorder 1, %s15
      %p177 = scmp.lt.s32.totalorder %s15, 3
      %p178 = pnand %p176, %p177
      %p179 = pneg %p178
      // Predicated region
      $region9: #{tpu_custom_call.1} parent=5 // pred_check
        _
      $region10: #{tpu_custom_call.1} parent=5 // pred_check_branch
        %181 = sbr.rel (%p178) target = $region12
      $region11: #{tpu_custom_call.1} parent=5 // pred_region
        %s182 = ssub.s32 %s15, 1
        // Predicated region
        $region13: #{tpu_custom_call.1} parent=11 // pred_check
          %p183 = pneg %p53
        $region14: #{tpu_custom_call.1} parent=11 // pred_check_branch
          %185 = sbr.rel (%p183) target = $region16
        $region15: #{tpu_custom_call.1} parent=11 // pred_region
          %s187 = ssub.s32 1024, 1024
          %188 = vsyncadd [#allocation5], %s187
          %s189 = smul.addr %s25, 128
          %s190 = scalar_lea.hbm %s0, %s189
          %s191 = sshll.u32 [#allocation4], 4
          %s192 = int_to_ptr.vmem [resolvable:$true] %s191
          %197 = dma.hbm_to_vmem [thread:$0]  %s190, 1024, %s192, [#allocation5], 128, 128, 8
        $region16: #{tpu_custom_call.1} parent=11 // pred_fallthru
          _
        // Predicated region
        $region17: #{tpu_custom_call.1} parent=11 // pred_check
          %p198 = pneg %p74
        $region18: #{tpu_custom_call.1} parent=11 // pred_check_branch
          %200 = sbr.rel (%p198) target = $region20
        $region19: #{tpu_custom_call.1} parent=11 // pred_region
          _
        $region20: #{tpu_custom_call.1} parent=11 // pred_fallthru
          _
        // Predicated region
        $region21: #{tpu_custom_call.1} parent=11 // pred_check
          %p201 = pneg %p95
        $region22: #{tpu_custom_call.1} parent=11 // pred_check_branch
          %203 = sbr.rel (%p201) target = $region24
        $region23: #{tpu_custom_call.1} parent=11 // pred_region
          _
        $region24: #{tpu_custom_call.1} parent=11 // pred_fallthru
          _
        // Predicated region
        $region25: #{tpu_custom_call.1} parent=11 // pred_check
          %p204 = pneg %p116
        $region26: #{tpu_custom_call.1} parent=11 // pred_check_branch
          %206 = sbr.rel (%p204) target = $region28
        $region27: #{tpu_custom_call.1} parent=11 // pred_region
          _
        $region28: #{tpu_custom_call.1} parent=11 // pred_fallthru
          _
      $region12: #{tpu_custom_call.1} parent=5 // pred_fallthru
        _
      %p207 = scmp.lt.s32.totalorder %s15, 2
      // Predicated region
      $region29: #{tpu_custom_call.1} parent=5 // pred_check
        %p208 = pneg %p207
      $region30: #{tpu_custom_call.1} parent=5 // pred_check_branch
        %210 = sbr.rel (%p208) target = $region32
      $region31: #{tpu_custom_call.1} parent=5 // pred_region
        _
      $region32: #{tpu_custom_call.1} parent=5 // pred_fallthru
        _
      %p211 = scmp.le.s32.totalorder 1, %s15
      %p212 = scmp.lt.s32.totalorder %s15, 3
      %p213 = pnand %p211, %p212
      %p214 = pneg %p213
      // Predicated region
      $region33: #{tpu_custom_call.1} parent=5 // pred_check
        _
      $region34: #{tpu_custom_call.1} parent=5 // pred_check_branch
        %216 = sbr.rel (%p213) target = $region36
      $region35: #{tpu_custom_call.1} parent=5 // pred_region
        %s217 = ssub.s32 %s15, 1
        // Predicated region
        $region37: #{tpu_custom_call.1} parent=35 // pred_check
          %p218 = pneg %p53
        $region38: #{tpu_custom_call.1} parent=35 // pred_check_branch
          %220 = sbr.rel (%p218) target = $region40
        $region39: #{tpu_custom_call.1} parent=35 // pred_region
          %221 = dma.done [#allocation5], 1024
        $region40: #{tpu_custom_call.1} parent=35 // pred_fallthru
          _
        %p222 = pneg %p53
        %p223 = pneg %p50
        %p224 = pneg %p74
        %p225 = pneg %p71
        %p226 = pneg %p95
        %p227 = pneg %p92
        %p228 = pneg %p116
        %p229 = pneg %p113
        %p230 = pneg %p142
        %p231 = pneg %p139
        %p232 = pneg %p168
        %p233 = pneg %p165
        %v234 = vld [vmem:[%s1] sm:$0xff]
        %v235 = vld [vmem:[#allocation4] sm:$0xff]
        %v236 = vld [vmem:[#allocation4 + $0x8] sm:$0xff]
        %v237 = vld [vmem:[#allocation4 + $0x10] sm:$0xff]
        %v238 = vld [vmem:[#allocation4 + $0x18] sm:$0xff]
        %v239 = vld [vmem:[#allocation4 + $0x20] sm:$0xff]
        %v240 = vld [vmem:[#allocation4 + $0x28] sm:$0xff]
        %v241 = vld [vmem:[#allocation4 + $0x30] sm:$0xff]
        %v242 = vld [vmem:[#allocation4 + $0x38] sm:$0xff]
        %vm243 = vcmask 523264
        %v245 = vsel %vm243, %v234, 0
        %247 = vmatprep.subr.mxu0 0.0
        %248 = vmatpush1.msra.mxu0 0.0
        %249 = vmatprep.subr.mxu0 0.0
        %250 = vmatpush1.msra.mxu0 0.0
        %251 = vmatprep.subr.mxu0 0.0
        %252 = vmatpush1.msra.mxu0 0.0
        %253 = vmatprep.subr.mxu0 0.0
        %254 = vmatpush1.msra.mxu0 0.0
        %255 = vmatprep.subr.mxu0 0.0
        %256 = vmatpush1.msra.mxu0 0.0
        %257 = vmatprep.subr.mxu0 0.0
        %258 = vmatpush1.msra.mxu0 0.0
        %259 = vmatprep.subr.mxu0 0.0
        %260 = vmatpush1.msra.mxu0 0.0
        %261 = vmatprep.subr.mxu0 0.0
        %262 = vmatpush1.msra.mxu0 0.0
        %263 = vmatprep.subr.mxu0 0.0
        %264 = vmatpush1.msra.mxu0 %v242
        %265 = vmatprep.subr.mxu0 0.0
        %266 = vmatpush1.msra.mxu0 %v241
        %267 = vmatprep.subr.mxu0 0.0
        %268 = vmatpush1.msra.mxu0 %v240
        %269 = vmatprep.subr.mxu0 0.0
        %270 = vmatpush1.msra.mxu0 %v239
        %271 = vmatprep.subr.mxu0 0.0
        %272 = vmatpush1.msra.mxu0 %v238
        %273 = vmatprep.subr.mxu0 0.0
        %274 = vmatpush1.msra.mxu0 %v237
        %275 = vmatprep.subr.mxu0 0.0
        %276 = vmatpush1.msra.mxu0 %v236
        %277 = vmatprep.subr.mxu0 0.0
        %278 = vmatpush1.msra.mxu0 %v235
        %279 = vmatprep.subr.mxu0 0.0
        %280 = vmatpush2.msra.mxu0 0.0
        %281 = vmatprep.subr.mxu0 0.0
        %282 = vmatpush2.msra.mxu0 0.0
        %283 = vmatprep.subr.mxu0 0.0
        %284 = vmatpush2.msra.mxu0 0.0
        %285 = vmatprep.subr.mxu0 0.0
        %286 = vmatpush2.msra.mxu0 0.0
        %287 = vmatprep.subr.mxu0 0.0
        %288 = vmatpush2.msra.mxu0 0.0
        %289 = vmatprep.subr.mxu0 0.0
        %290 = vmatpush2.msra.mxu0 0.0
        %291 = vmatprep.subr.mxu0 0.0
        %292 = vmatpush2.msra.mxu0 0.0
        %293 = vmatprep.subr.mxu0 0.0
        %294 = vmatpush2.msra.mxu0 0.0
        %295 = vmatprep.subr.mxu0 0.0
        %296 = vmatpush2.msra.mxu0 0.0
        %297 = vmatprep.subr.mxu0 0.0
        %298 = vmatpush2.msra.mxu0 0.0
        %299 = vmatprep.subr.mxu0 0.0
        %300 = vmatpush2.msra.mxu0 0.0
        %301 = vmatprep.subr.mxu0 0.0
        %302 = vmatpush2.msra.mxu0 0.0
        %303 = vmatprep.subr.mxu0 0.0
        %304 = vmatpush2.msra.mxu0 0.0
        %305 = vmatprep.subr.mxu0 0.0
        %306 = vmatpush2.msra.mxu0 0.0
        %307 = vmatprep.subr.mxu0 0.0
        %308 = vmatpush2.msra.mxu0 0.0
        %309 = vmatprep.subr.mxu0 0.0
        %310 = vmatpush2.msra.mxu0 0.0
        %311 = vmatprep.mubr.f32.mxu0 0.0
        %312 = vmatmul.mubr.f32.gmra.mxu0 %v245
        %v313 = vpop.f32.mrf.mxu0
        %v314 = vadd.f32 0.0, %v313
        %v315 = vpop.f32.mrf.mxu0
        %316 = vdwg.mxu0
        %p317 = scmp.eq.s32.totalorder %s24, 0
        %p318 = scmp.eq.s32.totalorder %s25, 0
        %p319 = pnand %p317, %p318
        %p320 = pneg %p319
        // Predicated region
        $region41: #{tpu_custom_call.1} parent=35 // pred_check
          _
        $region42: #{tpu_custom_call.1} parent=35 // pred_check_branch
          %322 = sbr.rel (%p319) target = $region44
        $region43: #{tpu_custom_call.1} parent=35 // pred_region
          %vm323 = vcmask 7168
          %324 = vst.msk [vmem:[#allocation2] sm:$0xff] %vm323, 0.0
          %325 = vst.msk [vmem:[#allocation3] sm:$0xff] %vm323, 0.0
        $region44: #{tpu_custom_call.1} parent=35 // pred_fallthru
          _
        // Predicated region
        $region45: #{tpu_custom_call.1} parent=35 // pred_check
          %p326 = pneg %p317
        $region46: #{tpu_custom_call.1} parent=35 // pred_check_branch
          %328 = sbr.rel (%p326) target = $region48
        $region47: #{tpu_custom_call.1} parent=35 // pred_region
          %v329 = vld [vmem:[#allocation2] sm:$0xff]
          %330 = vadd.xlane.f32.xlu0 %v314
          %v331 = vpop.xlane.xlu0 %330
          %v332 = vadd.f32 %v329, %v331
          %vm333 = vcmask 7168
          %334 = vst.msk [vmem:[#allocation2] sm:$0xff] %vm333, %v332
          %v335 = vld [vmem:[#allocation3] sm:$0xff]
          %v336 = vmul.f32 %v314, %v314
          %337 = vadd.xlane.f32.xlu0 %v336
          %v338 = vpop.xlane.xlu0 %337
          %v339 = vadd.f32 %v335, %v338
          %340 = vst.msk [vmem:[#allocation3] sm:$0xff] %vm333, %v339
          %341 = vst [vmem:[#allocation7] sm:$0xff] %v314
          %342 = vst [vmem:[#allocation8] sm:$0xff] %v314
        $region48: #{tpu_custom_call.1} parent=35 // pred_fallthru
          _
        %p343 = scmp.eq.s32.totalorder %s24, 1
        // Predicated region
        $region49: #{tpu_custom_call.1} parent=35 // pred_check
          %p344 = pneg %p343
        $region50: #{tpu_custom_call.1} parent=35 // pred_check_branch
          %346 = sbr.rel (%p344) target = $region52
        $region51: #{tpu_custom_call.1} parent=35 // pred_region
          %v347 = vld [vmem:[#allocation2] sm:$0xff]
          %v348 = vmul.f32 %v347, 0.0078125
          %v349 = vld [vmem:[#allocation3] sm:$0xff]
          %v350 = vmul.f32 %v349, 0.0078125
          %v351 = vmul.f32 %v348, %v348
          %v352 = vsub.f32 %v350, %v351
          %v353 = vmax.f32 %v352, 0.0
          %v354 = vadd.f32 %v353, 1e-05
          %v355 = vrsqrt.pop %v354
          %v356 = vld [vmem:[%s2] sm:$0xff]
          %v357 = vmul.f32 %v356, %v355
          %v358 = vld [vmem:[%s3] sm:$0xff]
          %v359 = vmul.f32 %v348, %v357
          %v360 = vsub.f32 %v358, %v359
          %362 = vset.pattern.permute.xlu0 0
          %363 = vperm.xlu0 %362, %v357
          %v364 = vpop.permute.xlu0 %363
          %v366 = vmul.f32 %v314, %v364
          %368 = vset.pattern.permute.xlu0 0
          %369 = vperm.xlu0 %368, %v360
          %v370 = vpop.permute.xlu0 %369
          %v372 = vadd.f32 %v366, %v370
          %vm373 = vcmp.ge.f32.partialorder %v372, 0.0
          %v374 = vmul.f32 %v372, 0.2
          %v375 = vsel %vm373, %v372, %v374
          %376 = vst [vmem:[#allocation7] sm:$0xff] %v375
          %377 = vst [vmem:[#allocation8] sm:$0xff] %v314
        $region52: #{tpu_custom_call.1} parent=35 // pred_fallthru
          _
        // Predicated region
        $region53: #{tpu_custom_call.1} parent=35 // pred_check
          %p378 = pneg %p139
        $region54: #{tpu_custom_call.1} parent=35 // pred_check_branch
          %380 = sbr.rel (%p378) target = $region56
        $region55: #{tpu_custom_call.1} parent=35 // pred_region
          %s382 = ssub.s32 128, 128
          %383 = vsyncadd [#allocation6], %s382
          %s384 = smul.addr %s25, 128
          %s385 = scalar_lea.hbm %s4, %s384
          %s387 = sshll.u32 [#allocation7], 4
          %s388 = int_to_ptr.vmem [resolvable:$true] %s387
          %390 = dma.vmem_to_hbm [thread:$0]  %s388, 128, %s385, [#allocation6]
        $region56: #{tpu_custom_call.1} parent=35 // pred_fallthru
          _
        // Predicated region
        $region57: #{tpu_custom_call.1} parent=35 // pred_check
          %p391 = pneg %p165
        $region58: #{tpu_custom_call.1} parent=35 // pred_check_branch
          %393 = sbr.rel (%p391) target = $region60
        $region59: #{tpu_custom_call.1} parent=35 // pred_region
          %s395 = ssub.s32 128, 128
          %396 = vsyncadd [#allocation9], %s395
          %s397 = smul.addr %s25, 128
          %s398 = scalar_lea.hbm %s5, %s397
          %s400 = sshll.u32 [#allocation8], 4
          %s401 = int_to_ptr.vmem [resolvable:$true] %s400
          %403 = dma.vmem_to_hbm [thread:$0]  %s401, 128, %s398, [#allocation9]
        $region60: #{tpu_custom_call.1} parent=35 // pred_fallthru
          _
        // Predicated region
        $region61: #{tpu_custom_call.1} parent=35 // pred_check
          %p404 = pneg %p139
        $region62: #{tpu_custom_call.1} parent=35 // pred_check_branch
          %406 = sbr.rel (%p404) target = $region64
        $region63: #{tpu_custom_call.1} parent=35 // pred_region
          %407 = dma.done [#allocation6], 128
        $region64: #{tpu_custom_call.1} parent=35 // pred_fallthru
          _
        // Predicated region
        $region65: #{tpu_custom_call.1} parent=35 // pred_check
          %p408 = pneg %p165
        $region66: #{tpu_custom_call.1} parent=35 // pred_check_branch
          %410 = sbr.rel (%p408) target = $region68
        $region67: #{tpu_custom_call.1} parent=35 // pred_region
          %411 = dma.done [#allocation9], 128
        $region68: #{tpu_custom_call.1} parent=35 // pred_fallthru
          _
      $region36: #{tpu_custom_call.1} parent=5 // pred_fallthru
        _
      %p412 = scmp.le.s32.totalorder 2, %s15
      // Predicated region
      $region69: #{tpu_custom_call.1} parent=5 // pred_check
        %p413 = pneg %p412
      $region70: #{tpu_custom_call.1} parent=5 // pred_check_branch
        %415 = sbr.rel (%p413) target = $region72
      $region71: #{tpu_custom_call.1} parent=5 // pred_region
        %s416 = ssub.s32 %s15, 2
      $region72: #{tpu_custom_call.1} parent=5 // pred_fallthru
        _
    $region6: #{tpu_custom_call.1} parent=1 // loop_footer
      %s19 = sadd.s32 1, %s15
    $region7: #{tpu_custom_call.1} parent=1 // loop_footer_branch
      %14 = sbr.rel target = $region3
    $region8: #{tpu_custom_call.1} parent=1 // loop_exit
      _
    %417 = vsyncpa [#allocation5], 1
    %s418 = scalar_lea.sflag [#allocation5], 1
    %419 = vsyncpa %s418, 1
    %420 = vsyncpa [#allocation6], 1
    %s421 = scalar_lea.sflag [#allocation6], 1
    %422 = vsyncpa %s421, 1
    %423 = vsyncpa [#allocation9], 1

</llo_original>
